<compile_context>
chip_gen: v7x
topology: tpu7x:2x2x1
jax: 0.10.0
libtpu: 0.0.40
codegen_flags: <defaults>
</compile_context>

<pallas_src>
import functools

import jax
import jax.numpy as jnp
from jax.experimental import pallas as pl
from jax.experimental.pallas import tpu as pltpu

LANE = 128          # vreg lane width
NEG_BIG = -1e30     # safe "-inf" for masking padded action columns


def _round_up(x: int, m: int) -> int:
    return ((x + m - 1) // m) * m


def _policy_kernel(x_ref, w1_ref, b1_ref, w2_ref, b2_ref, w3_ref, b3_ref,
                   out_ref):
    # ---- fc1 + ReLU (bf16 MXU dot, f32 accumulate / epilogue) ----
    h1 = jnp.dot(x_ref[...], w1_ref[...], preferred_element_type=jnp.float32)
    h1 = jnp.maximum(h1 + b1_ref[...], 0.0)              # (TB, H_P) + (1, H_P)

    # ---- fc2 + ReLU ----
    h2 = jnp.dot(h1.astype(w2_ref.dtype), w2_ref[...],
                 preferred_element_type=jnp.float32)
    h2 = jnp.maximum(h2 + b2_ref[...], 0.0)

    # ---- fc3 : padded action columns already carry -1e30 via b3 ----
    logits = jnp.dot(h2.astype(w3_ref.dtype), w3_ref[...],
                     preferred_element_type=jnp.float32)
    logits = logits + b3_ref[...]                        # (TB, O_P)

    # ---- numerically-stable softmax along last dim (exact normalization) ----
    m = jnp.max(logits, axis=-1, keepdims=True)
    e = jnp.exp(logits - m)                              # exp(-1e30 - m) == 0 on pads
    denom = jnp.sum(e, axis=-1, keepdims=True)
    out_ref[...] = (e / denom).astype(out_ref.dtype)


@functools.partial(jax.jit,
                   static_argnames=("block_batch", "use_bf16", "out_dtype"))
def policy_network_forward(x, params, *, block_batch: int = 1024,
                           use_bf16: bool = True, out_dtype=jnp.float32):
    """Fused MLP + softmax forward.

    x:      (B, input_dim) float32
    params: dict with w1 (in,H), b1 (1,H), w2 (H,H), b2 (1,H), w3 (H,O), b3 (1,O)
    Returns (B, O) `out_dtype` action probabilities (rows sum to 1).
    """
    B, in_dim = x.shape
    H = params["w1"].shape[1]
    O = params["w3"].shape[1]

    compute_dtype = jnp.bfloat16 if use_bf16 else jnp.float32
    packing = 16 if use_bf16 else 8          # sublanes per packed vreg

    # Feature dims of the *hidden/output* matmuls are lane-padded to 128; the
    # input feature dim is left as-is (BlockSpec uses the full array dim).
    h_p = _round_up(H, LANE)
    o_p = _round_up(O, LANE)

    # Batch tiling: big tiles (less per-step overhead), packing-aligned, and at
    # least two grid blocks when the batch allows it (v7x megacore sharding).
    tb = min(_round_up(block_batch, packing), _round_up(B, packing))
    if B >= 2 * packing and _round_up(B, packing) <= tb:
        tb = _round_up(pl.cdiv(B, 2), packing)
    b_p = _round_up(B, tb)
    num_blocks = b_p // tb

    # ---- pad / cast (all fused under jit) ----
    x_p = jnp.pad(x, ((0, b_p - B), (0, 0))).astype(compute_dtype)
    w1 = jnp.pad(params["w1"], ((0, 0), (0, h_p - H))).astype(compute_dtype)
    w2 = jnp.pad(params["w2"], ((0, h_p - H), (0, h_p - H))).astype(compute_dtype)
    w3 = jnp.pad(params["w3"], ((0, h_p - H), (0, o_p - O))).astype(compute_dtype)
    b1 = jnp.pad(params["b1"], ((0, 0), (0, h_p - H))).astype(jnp.float32)
    b2 = jnp.pad(params["b2"], ((0, 0), (0, h_p - H))).astype(jnp.float32)
    # Padded action columns get a huge negative bias -> softmax prob exactly 0.
    b3 = jnp.pad(params["b3"].astype(jnp.float32), ((0, 0), (0, o_p - O)),
                 constant_values=NEG_BIG)

    # Weights/biases use a constant index_map -> VMEM-resident across the grid.
    resident = lambda a: pl.BlockSpec(a.shape, lambda i: (0, 0))

    out_p = pl.pallas_call(
        _policy_kernel,
        out_shape=jax.ShapeDtypeStruct((b_p, o_p), out_dtype),
        grid=(num_blocks,),
        in_specs=[
            pl.BlockSpec((tb, in_dim), lambda i: (i, 0)),   # x: tiled over batch
            resident(w1), resident(b1),
            resident(w2), resident(b2),
            resident(w3), resident(b3),
        ],
        out_specs=pl.BlockSpec((tb, o_p), lambda i: (i, 0)),
        compiler_params=pltpu.CompilerParams(
            dimension_semantics=("parallel",)),
    )(x_p, w1, b1, w2, b2, w3, b3)

    return out_p[:B, :O]


def init_params(key, input_dim, hidden_dim, output_dim):
    """Deterministic init mimicking nn.Linear's uniform(-1/sqrt(fan_in), ...)."""
    ks = jax.random.split(key, 6)

    def linear(kw, kb, fan_in, fan_out):
        bound = 1.0 / jnp.sqrt(fan_in)
        w = jax.random.uniform(kw, (fan_in, fan_out), jnp.float32, -bound, bound)
        b = jax.random.uniform(kb, (1, fan_out), jnp.float32, -bound, bound)
        return w, b

    w1, b1 = linear(ks[0], ks[1], input_dim, hidden_dim)
    w2, b2 = linear(ks[2], ks[3], hidden_dim, hidden_dim)
    w3, b3 = linear(ks[4], ks[5], hidden_dim, output_dim)
    return {"w1": w1, "b1": b1, "w2": w2, "b2": b2, "w3": w3, "b3": b3}


def _reference_forward(x, p):
    h1 = jnp.maximum(x @ p["w1"] + p["b1"], 0.0)
    h2 = jnp.maximum(h1 @ p["w2"] + p["b2"], 0.0)
    logits = h2 @ p["w3"] + p["b3"]
    return jax.nn.softmax(logits, axis=-1)


if __name__ == "__main__":
    key = jax.random.PRNGKey(0)
    k_x, k_p = jax.random.split(key)

    batch = 8
    input_dim = 16     # state feature vector
    hidden_dim = 32
    output_dim = 8     # number of discrete actions

    x = jax.random.normal(k_x, (batch, input_dim), jnp.float32)
    params = init_params(k_p, input_dim, hidden_dim, output_dim)

    out = policy_network_forward(x, params)
    out = jax.block_until_ready(out)

    ref = _reference_forward(x, params)
    assert out.shape == (batch, output_dim)
    # bf16 MXU dots -> compare with modest tolerance.
    assert jnp.allclose(out, ref, atol=2e-2, rtol=0.0), "mismatch vs reference"
    # exact softmax normalization -> rows sum to 1 tightly
    assert jnp.allclose(jnp.sum(out, axis=-1), 1.0, atol=1e-3)

    print("KERNEL_OK")
</pallas_src>

<mosaic_0001>
module attributes {stable_mosaic.version = 11 : i64} {
  func.func @_policy_kernel(%arg0: i32, %arg1: memref<16x16xbf16, #tpu.memory_space<vmem>>, %arg2: memref<16x128xbf16, #tpu.memory_space<vmem>>, %arg3: memref<1x128xf32, #tpu.memory_space<vmem>>, %arg4: memref<128x128xbf16, #tpu.memory_space<vmem>>, %arg5: memref<1x128xf32, #tpu.memory_space<vmem>>, %arg6: memref<128x128xbf16, #tpu.memory_space<vmem>>, %arg7: memref<1x128xf32, #tpu.memory_space<vmem>>, %arg8: memref<16x128xf32, #tpu.memory_space<vmem>>) attributes {dimension_semantics = [#tpu.dimension_semantics<parallel>], iteration_bounds = array<i64: 1>, scalar_prefetch = 0 : i64, scratch_operands = 0 : i64, tpu.core_type = #tpu.core_type<tc>, window_params = [{transform_indices = @transform_0, window_bounds = array<i64: 16, 16>}, {pipeline_mode = #tpu.pipeline_mode<synchronous>, transform_indices = @transform_1, window_bounds = array<i64: 16, 128>}, {pipeline_mode = #tpu.pipeline_mode<synchronous>, transform_indices = @transform_2, window_bounds = array<i64: 1, 128>}, {pipeline_mode = #tpu.pipeline_mode<synchronous>, transform_indices = @transform_3, window_bounds = array<i64: 128, 128>}, {pipeline_mode = #tpu.pipeline_mode<synchronous>, transform_indices = @transform_4, window_bounds = array<i64: 1, 128>}, {pipeline_mode = #tpu.pipeline_mode<synchronous>, transform_indices = @transform_5, window_bounds = array<i64: 128, 128>}, {pipeline_mode = #tpu.pipeline_mode<synchronous>, transform_indices = @transform_6, window_bounds = array<i64: 1, 128>}, {transform_indices = @transform_7, window_bounds = array<i64: 16, 128>}]} {
    %c0 = arith.constant 0 : index
    %c0_0 = arith.constant 0 : index
    %0 = vector.load %arg1[%c0, %c0_0] : memref<16x16xbf16, #tpu.memory_space<vmem>>, vector<16x16xbf16>
    %c0_1 = arith.constant 0 : index
    %c0_2 = arith.constant 0 : index
    %1 = vector.load %arg2[%c0_1, %c0_2] : memref<16x128xbf16, #tpu.memory_space<vmem>>, vector<16x128xbf16>
    %cst = arith.constant dense<0.000000e+00> : vector<16x128xf32>
    %2 = tpu.matmul %0, %1, %cst {dimension_numbers = #tpu.dot_dimension_numbers<[1], [0], [0], [1], [0, 0, 1, 1], [], []>} : vector<16x16xbf16>, vector<16x128xbf16>, vector<16x128xf32> -> vector<16x128xf32>
    %c0_3 = arith.constant 0 : index
    %c0_4 = arith.constant 0 : index
    %3 = vector.load %arg3[%c0_3, %c0_4] : memref<1x128xf32, #tpu.memory_space<vmem>>, vector<1x128xf32>
    %4 = vector.broadcast %3 : vector<1x128xf32> to vector<16x128xf32>
    %5 = arith.addf %2, %4 : vector<16x128xf32>
    %cst_5 = arith.constant 0.000000e+00 : f32
    %6 = vector.broadcast %cst_5 : f32 to vector<16x128xf32>
    %7 = arith.maximumf %5, %6 : vector<16x128xf32>
    %8 = arith.truncf %7 : vector<16x128xf32> to vector<16x128xbf16>
    %c0_6 = arith.constant 0 : index
    %c0_7 = arith.constant 0 : index
    %9 = vector.load %arg4[%c0_6, %c0_7] : memref<128x128xbf16, #tpu.memory_space<vmem>>, vector<128x128xbf16>
    %cst_8 = arith.constant dense<0.000000e+00> : vector<16x128xf32>
    %10 = tpu.matmul %8, %9, %cst_8 {dimension_numbers = #tpu.dot_dimension_numbers<[1], [0], [0], [1], [0, 0, 1, 1], [], []>} : vector<16x128xbf16>, vector<128x128xbf16>, vector<16x128xf32> -> vector<16x128xf32>
    %c0_9 = arith.constant 0 : index
    %c0_10 = arith.constant 0 : index
    %11 = vector.load %arg5[%c0_9, %c0_10] : memref<1x128xf32, #tpu.memory_space<vmem>>, vector<1x128xf32>
    %12 = vector.broadcast %11 : vector<1x128xf32> to vector<16x128xf32>
    %13 = arith.addf %10, %12 : vector<16x128xf32>
    %cst_11 = arith.constant 0.000000e+00 : f32
    %14 = vector.broadcast %cst_11 : f32 to vector<16x128xf32>
    %15 = arith.maximumf %13, %14 : vector<16x128xf32>
    %16 = arith.truncf %15 : vector<16x128xf32> to vector<16x128xbf16>
    %c0_12 = arith.constant 0 : index
    %c0_13 = arith.constant 0 : index
    %17 = vector.load %arg6[%c0_12, %c0_13] : memref<128x128xbf16, #tpu.memory_space<vmem>>, vector<128x128xbf16>
    %cst_14 = arith.constant dense<0.000000e+00> : vector<16x128xf32>
    %18 = tpu.matmul %16, %17, %cst_14 {dimension_numbers = #tpu.dot_dimension_numbers<[1], [0], [0], [1], [0, 0, 1, 1], [], []>} : vector<16x128xbf16>, vector<128x128xbf16>, vector<16x128xf32> -> vector<16x128xf32>
    %c0_15 = arith.constant 0 : index
    %c0_16 = arith.constant 0 : index
    %19 = vector.load %arg7[%c0_15, %c0_16] : memref<1x128xf32, #tpu.memory_space<vmem>>, vector<1x128xf32>
    %20 = vector.broadcast %19 : vector<1x128xf32> to vector<16x128xf32>
    %21 = arith.addf %18, %20 : vector<16x128xf32>
    %cst_17 = arith.constant dense<0xFF800000> : vector<16xf32>
    %22 = vector.multi_reduction <maximumf>, %21, %cst_17 [1] : vector<16x128xf32> to vector<16xf32>
    %23 = vector.shape_cast %22 : vector<16xf32> to vector<16x1xf32>
    %24 = vector.broadcast %23 : vector<16x1xf32> to vector<16x128xf32>
    %25 = arith.subf %21, %24 : vector<16x128xf32>
    %26 = math.exp %25 : vector<16x128xf32>
    %cst_18 = arith.constant dense<0.000000e+00> : vector<16xf32>
    %27 = vector.multi_reduction <add>, %26, %cst_18 [1] : vector<16x128xf32> to vector<16xf32>
    %28 = vector.shape_cast %27 : vector<16xf32> to vector<16x1xf32>
    %29 = vector.broadcast %28 : vector<16x1xf32> to vector<16x128xf32>
    %30 = arith.divf %26, %29 : vector<16x128xf32>
    %c0_19 = arith.constant 0 : index
    %c0_20 = arith.constant 0 : index
    %31 = vector.load %arg8[%c0_19, %c0_20] : memref<16x128xf32, #tpu.memory_space<vmem>>, vector<16x128xf32>
    tpu.vector_store %arg8[%c0_19, %c0_20], %30 {strides = array<i32>} : memref<16x128xf32, #tpu.memory_space<vmem>>, vector<16x128xf32>,
    return
  }
  func.func @transform_0(%arg0: i32) -> (i32, i32) {
    %c0_i32 = arith.constant 0 : i32
    %c0_i32_0 = arith.constant 0 : i32
    return %arg0, %c0_i32 : i32, i32
  }
  func.func @transform_1(%arg0: i32) -> (i32, i32) {
    %c0_i32 = arith.constant 0 : i32
    %c0_i32_0 = arith.constant 0 : i32
    %c0_i32_1 = arith.constant 0 : i32
    return %c0_i32, %c0_i32_0 : i32, i32
  }
  func.func @transform_2(%arg0: i32) -> (i32, i32) {
    %c0_i32 = arith.constant 0 : i32
    %c0_i32_0 = arith.constant 0 : i32
    %c0_i32_1 = arith.constant 0 : i32
    return %c0_i32, %c0_i32_0 : i32, i32
  }
  func.func @transform_3(%arg0: i32) -> (i32, i32) {
    %c0_i32 = arith.constant 0 : i32
    %c0_i32_0 = arith.constant 0 : i32
    %c0_i32_1 = arith.constant 0 : i32
    return %c0_i32, %c0_i32_0 : i32, i32
  }
  func.func @transform_4(%arg0: i32) -> (i32, i32) {
    %c0_i32 = arith.constant 0 : i32
    %c0_i32_0 = arith.constant 0 : i32
    %c0_i32_1 = arith.constant 0 : i32
    return %c0_i32, %c0_i32_0 : i32, i32
  }
  func.func @transform_5(%arg0: i32) -> (i32, i32) {
    %c0_i32 = arith.constant 0 : i32
    %c0_i32_0 = arith.constant 0 : i32
    %c0_i32_1 = arith.constant 0 : i32
    return %c0_i32, %c0_i32_0 : i32, i32
  }
  func.func @transform_6(%arg0: i32) -> (i32, i32) {
    %c0_i32 = arith.constant 0 : i32
    %c0_i32_0 = arith.constant 0 : i32
    %c0_i32_1 = arith.constant 0 : i32
    return %c0_i32, %c0_i32_0 : i32, i32
  }
  func.func @transform_7(%arg0: i32) -> (i32, i32) {
    %c0_i32 = arith.constant 0 : i32
    %c0_i32_0 = arith.constant 0 : i32
    return %arg0, %c0_i32 : i32, i32
  }
}

</mosaic_0001>

<llo_original>
// kernel: policy_network_forward.1
$region0: #{policy_network_forward.1}
  #allocation0 [shape = 'u32[]', space=smem, size = 0x4, offset = 0x4, fixed_abs, tag = 'smem constant byte address 0x4 - core index']
  #allocation1 [shape = 'u32[144,128]{1,0:T(1,128)}', space=vmem, size = 0x12000, scoped, tag = 'internal scratch']
  %s0 = inlined_call_operand.vmem [shape: bf16[16,16], index: 0, kind: input, shape index: {}]
  %s1 = inlined_call_operand.vmem [shape: bf16[16,128], index: 1, kind: input, shape index: {}]
  %s2 = inlined_call_operand.vmem [shape: f32[1,128], index: 2, kind: input, shape index: {}]
  %s3 = inlined_call_operand.vmem [shape: bf16[128,128], index: 3, kind: input, shape index: {}]
  %s4 = inlined_call_operand.vmem [shape: f32[1,128], index: 4, kind: input, shape index: {}]
  %s5 = inlined_call_operand.vmem [shape: bf16[128,128], index: 5, kind: input, shape index: {}]
  %s6 = inlined_call_operand.vmem [shape: f32[1,128], index: 6, kind: input, shape index: {}]
  %s7 = inlined_call_operand.vmem [shape: f32[16,128], index: 7, kind: output, shape index: {}]
  %s8 = sld [smem:[#allocation0]]
  $region38: #{policy_network_forward.1} parent=0
    _
  %s10 = ssub.s32 1, %s8
  %s11 = scalar_select 0, %s10, %s8
  // Predicated region
  $region2: #{policy_network_forward.1} parent=0 // pred_check
    _
  $region3: #{policy_network_forward.1} parent=0 // pred_check_branch
    %13 = sbr.rel (0) target = $region5
  $region4: #{policy_network_forward.1} parent=0 // pred_region
    _
  $region5: #{policy_network_forward.1} parent=0 // pred_fallthru
    _
  // Predicated region
  $region6: #{policy_network_forward.1} parent=0 // pred_check
    _
  $region7: #{policy_network_forward.1} parent=0 // pred_check_branch
    %15 = sbr.rel (0) target = $region9
  $region8: #{policy_network_forward.1} parent=0 // pred_region
    _
  $region9: #{policy_network_forward.1} parent=0 // pred_fallthru
    _
  // Predicated region
  $region10: #{policy_network_forward.1} parent=0 // pred_check
    _
  $region11: #{policy_network_forward.1} parent=0 // pred_check_branch
    %17 = sbr.rel (0) target = $region13
  $region12: #{policy_network_forward.1} parent=0 // pred_region
    _
  $region13: #{policy_network_forward.1} parent=0 // pred_fallthru
    _
  // Predicated region
  $region14: #{policy_network_forward.1} parent=0 // pred_check
    _
  $region15: #{policy_network_forward.1} parent=0 // pred_check_branch
    %19 = sbr.rel (0) target = $region17
  $region16: #{policy_network_forward.1} parent=0 // pred_region
    _
  $region17: #{policy_network_forward.1} parent=0 // pred_fallthru
    _
  // Predicated region
  $region18: #{policy_network_forward.1} parent=0 // pred_check
    _
  $region19: #{policy_network_forward.1} parent=0 // pred_check_branch
    %21 = sbr.rel (0) target = $region21
  $region20: #{policy_network_forward.1} parent=0 // pred_region
    _
  $region21: #{policy_network_forward.1} parent=0 // pred_fallthru
    _
  // Predicated region
  $region22: #{policy_network_forward.1} parent=0 // pred_check
    _
  $region23: #{policy_network_forward.1} parent=0 // pred_check_branch
    %23 = sbr.rel (0) target = $region25
  $region24: #{policy_network_forward.1} parent=0 // pred_region
    _
  $region25: #{policy_network_forward.1} parent=0 // pred_fallthru
    _
  // Predicated region
  $region26: #{policy_network_forward.1} parent=0 // pred_check
    _
  $region27: #{policy_network_forward.1} parent=0 // pred_check_branch
    %25 = sbr.rel (0) target = $region29
  $region28: #{policy_network_forward.1} parent=0 // pred_region
    _
  $region29: #{policy_network_forward.1} parent=0 // pred_fallthru
    _
  %v27 = vld [vmem:[%s0] sm:$0xf]
  %v28 = vld [vmem:[%s0 + $0x4] sm:$0xf]
  %v29 = vld [vmem:[%s1] sm:$0xf]
  %v30 = vld [vmem:[%s1 + $0x4] sm:$0xf]
  %v31 = vld [vmem:[%s2] sm:$0x1]
  %v33 = vlaneseq
  %v34 = vshrl.u32 %v33, 7
  %v35 = vsub.s32 0, %v34
  %v36 = vrot.slane %v31, %v35
  %v40 = vunpack.c.l.b16 %v27
  %v41 = vunpack.c.l.b16 %v28
  %v42 = vpack.c.b16 %v41, %v40
  %v45 = vunpack.c.l.b16 %v29
  %v46 = vunpack.c.l.b16 %v30
  %v47 = vpack.c.b16 %v46, %v45
  %vm49 = vcmask 130048
  %v51 = vsel %vm49, %v42, 0
  %53 = vmatprep.subr.bf16.mxu0 0
  %54 = vmatpush1.bf16.msra.mxu0 %v47
  %55 = vmatprep.subr.bf16.mxu0 0
  %56 = vmatpush1.bf16.msra.mxu0 0
  %57 = vmatprep.subr.bf16.mxu0 0
  %58 = vmatpush1.bf16.msra.mxu0 0
  %59 = vmatprep.subr.bf16.mxu0 0
  %60 = vmatpush1.bf16.msra.mxu0 0
  %61 = vmatprep.subr.bf16.mxu0 0
  %62 = vmatpush1.bf16.msra.mxu0 0
  %63 = vmatprep.subr.bf16.mxu0 0
  %64 = vmatpush1.bf16.msra.mxu0 0
  %65 = vmatprep.subr.bf16.mxu0 0
  %66 = vmatpush1.bf16.msra.mxu0 0
  %67 = vmatprep.subr.bf16.mxu0 0
  %68 = vmatpush1.bf16.msra.mxu0 0
  %69 = vmatprep.subr.bf16.mxu0 0
  %70 = vmatpush1.bf16.msra.mxu0 0
  %71 = vmatprep.subr.bf16.mxu0 0
  %72 = vmatpush1.bf16.msra.mxu0 0
  %73 = vmatprep.subr.bf16.mxu0 0
  %74 = vmatpush1.bf16.msra.mxu0 0
  %75 = vmatprep.subr.bf16.mxu0 0
  %76 = vmatpush1.bf16.msra.mxu0 0
  %77 = vmatprep.subr.bf16.mxu0 0
  %78 = vmatpush1.bf16.msra.mxu0 0
  %79 = vmatprep.subr.bf16.mxu0 0
  %80 = vmatpush1.bf16.msra.mxu0 0
  %81 = vmatprep.subr.bf16.mxu0 0
  %82 = vmatpush1.bf16.msra.mxu0 0
  %83 = vmatprep.subr.bf16.mxu0 0
  %84 = vmatpush1.bf16.msra.mxu0 0
  %85 = vmatprep.mubr.bf16.mxu0 0
  %86 = vmatmul.mubr.bf16.gmra.mrb[0].mxu0 %v51
  %v87 = vpop.f32.mrb[0].mxu0
  %v88 = vadd.f32 %v36, %v87
  %v89 = vpop.f32.mrb[0].mxu0
  %v90 = vpop.f32.mrb[0].mxu0
  %v91 = vadd.f32 %v36, %v90
  %v92 = vpop.f32.mrb[0].mxu0
  %93 = vdwg.mxu0
  %v94 = vmax.f32 %v88, 0.0
  %v95 = vmax.f32 %v91, 0.0
  %v96 = vpack.c.bf16 %v95, %v94
  %v97 = vld [vmem:[%s3] sm:$0xf]
  %v98 = vld [vmem:[%s3 + $0x4] sm:$0xf]
  %v99 = vld [vmem:[%s3 + $0x8] sm:$0xf]
  %v100 = vld [vmem:[%s3 + $0xc] sm:$0xf]
  %v101 = vld [vmem:[%s3 + $0x10] sm:$0xf]
  %v102 = vld [vmem:[%s3 + $0x14] sm:$0xf]
  %v103 = vld [vmem:[%s3 + $0x18] sm:$0xf]
  %v104 = vld [vmem:[%s3 + $0x1c] sm:$0xf]
  %v105 = vld [vmem:[%s3 + $0x20] sm:$0xf]
  %v106 = vld [vmem:[%s3 + $0x24] sm:$0xf]
  %v107 = vld [vmem:[%s3 + $0x28] sm:$0xf]
  %v108 = vld [vmem:[%s3 + $0x2c] sm:$0xf]
  %v109 = vld [vmem:[%s3 + $0x30] sm:$0xf]
  %v110 = vld [vmem:[%s3 + $0x34] sm:$0xf]
  %v111 = vld [vmem:[%s3 + $0x38] sm:$0xf]
  %v112 = vld [vmem:[%s3 + $0x3c] sm:$0xf]
  %v113 = vld [vmem:[%s4] sm:$0x1]
  %v115 = vlaneseq
  %v116 = vshrl.u32 %v115, 7
  %v117 = vsub.s32 0, %v116
  %v118 = vrot.slane %v113, %v117
  %v136 = vunpack.c.l.b16 %v97
  %v137 = vunpack.c.l.b16 %v98
  %v138 = vunpack.c.l.b16 %v99
  %v139 = vunpack.c.l.b16 %v100
  %v140 = vunpack.c.l.b16 %v101
  %v141 = vunpack.c.l.b16 %v102
  %v142 = vunpack.c.l.b16 %v103
  %v143 = vunpack.c.l.b16 %v104
  %v144 = vunpack.c.l.b16 %v105
  %v145 = vunpack.c.l.b16 %v106
  %v146 = vunpack.c.l.b16 %v107
  %v147 = vunpack.c.l.b16 %v108
  %v148 = vunpack.c.l.b16 %v109
  %v149 = vunpack.c.l.b16 %v110
  %v150 = vunpack.c.l.b16 %v111
  %v151 = vunpack.c.l.b16 %v112
  %v152 = vpack.c.b16 %v137, %v136
  %v153 = vpack.c.b16 %v139, %v138
  %v154 = vpack.c.b16 %v141, %v140
  %v155 = vpack.c.b16 %v143, %v142
  %v156 = vpack.c.b16 %v145, %v144
  %v157 = vpack.c.b16 %v147, %v146
  %v158 = vpack.c.b16 %v149, %v148
  %v159 = vpack.c.b16 %v151, %v150
  %168 = vmatprep.subr.bf16.mxu0 0
  %169 = vmatpush1.bf16.msra.mxu0 %v152
  %170 = vmatprep.subr.bf16.mxu0 0
  %171 = vmatpush1.bf16.msra.mxu0 %v153
  %172 = vmatprep.subr.bf16.mxu0 0
  %173 = vmatpush1.bf16.msra.mxu0 %v154
  %174 = vmatprep.subr.bf16.mxu0 0
  %175 = vmatpush1.bf16.msra.mxu0 %v155
  %176 = vmatprep.subr.bf16.mxu0 0
  %177 = vmatpush1.bf16.msra.mxu0 %v156
  %178 = vmatprep.subr.bf16.mxu0 0
  %179 = vmatpush1.bf16.msra.mxu0 %v157
  %180 = vmatprep.subr.bf16.mxu0 0
  %181 = vmatpush1.bf16.msra.mxu0 %v158
  %182 = vmatprep.subr.bf16.mxu0 0
  %183 = vmatpush1.bf16.msra.mxu0 %v159
  %184 = vmatprep.subr.bf16.mxu0 0
  %185 = vmatpush1.bf16.msra.mxu0 0
  %186 = vmatprep.subr.bf16.mxu0 0
  %187 = vmatpush1.bf16.msra.mxu0 0
  %188 = vmatprep.subr.bf16.mxu0 0
  %189 = vmatpush1.bf16.msra.mxu0 0
  %190 = vmatprep.subr.bf16.mxu0 0
  %191 = vmatpush1.bf16.msra.mxu0 0
  %192 = vmatprep.subr.bf16.mxu0 0
  %193 = vmatpush1.bf16.msra.mxu0 0
  %194 = vmatprep.subr.bf16.mxu0 0
  %195 = vmatpush1.bf16.msra.mxu0 0
  %196 = vmatprep.subr.bf16.mxu0 0
  %197 = vmatpush1.bf16.msra.mxu0 0
  %198 = vmatprep.subr.bf16.mxu0 0
  %199 = vmatpush1.bf16.msra.mxu0 0
  %200 = vmatprep.mubr.bf16.mxu0 0
  %201 = vmatmul.mubr.bf16.gmra.mrb[0].mxu0 %v96
  %v202 = vpop.f32.mrb[0].mxu0
  %v203 = vadd.f32 %v118, %v202
  %v204 = vpop.f32.mrb[0].mxu0
  %v205 = vpop.f32.mrb[0].mxu0
  %v206 = vadd.f32 %v118, %v205
  %v207 = vpop.f32.mrb[0].mxu0
  %208 = vdwg.mxu0
  %v209 = vmax.f32 %v203, 0.0
  %v210 = vmax.f32 %v206, 0.0
  %v211 = vpack.c.bf16 %v210, %v209
  %v212 = vld [vmem:[%s5] sm:$0xf]
  %v213 = vld [vmem:[%s5 + $0x4] sm:$0xf]
  %v214 = vld [vmem:[%s5 + $0x8] sm:$0xf]
  %v215 = vld [vmem:[%s5 + $0xc] sm:$0xf]
  %v216 = vld [vmem:[%s5 + $0x10] sm:$0xf]
  %v217 = vld [vmem:[%s5 + $0x14] sm:$0xf]
  %v218 = vld [vmem:[%s5 + $0x18] sm:$0xf]
  %v219 = vld [vmem:[%s5 + $0x1c] sm:$0xf]
  %v220 = vld [vmem:[%s5 + $0x20] sm:$0xf]
  %v221 = vld [vmem:[%s5 + $0x24] sm:$0xf]
  %v222 = vld [vmem:[%s5 + $0x28] sm:$0xf]
  %v223 = vld [vmem:[%s5 + $0x2c] sm:$0xf]
  %v224 = vld [vmem:[%s5 + $0x30] sm:$0xf]
  %v225 = vld [vmem:[%s5 + $0x34] sm:$0xf]
  %v226 = vld [vmem:[%s5 + $0x38] sm:$0xf]
  %v227 = vld [vmem:[%s5 + $0x3c] sm:$0xf]
  %v228 = vld [vmem:[%s6] sm:$0x1]
  %v230 = vlaneseq
  %v231 = vshrl.u32 %v230, 7
  %v232 = vsub.s32 0, %v231
  %v233 = vrot.slane %v228, %v232
  %v251 = vunpack.c.l.b16 %v212
  %v252 = vunpack.c.l.b16 %v213
  %v253 = vunpack.c.l.b16 %v214
  %v254 = vunpack.c.l.b16 %v215
  %v255 = vunpack.c.l.b16 %v216
  %v256 = vunpack.c.l.b16 %v217
  %v257 = vunpack.c.l.b16 %v218
  %v258 = vunpack.c.l.b16 %v219
  %v259 = vunpack.c.l.b16 %v220
  %v260 = vunpack.c.l.b16 %v221
  %v261 = vunpack.c.l.b16 %v222
  %v262 = vunpack.c.l.b16 %v223
  %v263 = vunpack.c.l.b16 %v224
  %v264 = vunpack.c.l.b16 %v225
  %v265 = vunpack.c.l.b16 %v226
  %v266 = vunpack.c.l.b16 %v227
  %v267 = vpack.c.b16 %v252, %v251
  %v268 = vpack.c.b16 %v254, %v253
  %v269 = vpack.c.b16 %v256, %v255
  %v270 = vpack.c.b16 %v258, %v257
  %v271 = vpack.c.b16 %v260, %v259
  %v272 = vpack.c.b16 %v262, %v261
  %v273 = vpack.c.b16 %v264, %v263
  %v274 = vpack.c.b16 %v266, %v265
  %283 = vmatprep.subr.bf16.mxu0 0
  %284 = vmatpush1.bf16.msra.mxu0 %v267
  %285 = vmatprep.subr.bf16.mxu0 0
  %286 = vmatpush1.bf16.msra.mxu0 %v268
  %287 = vmatprep.subr.bf16.mxu0 0
  %288 = vmatpush1.bf16.msra.mxu0 %v269
  %289 = vmatprep.subr.bf16.mxu0 0
  %290 = vmatpush1.bf16.msra.mxu0 %v270
  %291 = vmatprep.subr.bf16.mxu0 0
  %292 = vmatpush1.bf16.msra.mxu0 %v271
  %293 = vmatprep.subr.bf16.mxu0 0
  %294 = vmatpush1.bf16.msra.mxu0 %v272
  %295 = vmatprep.subr.bf16.mxu0 0
  %296 = vmatpush1.bf16.msra.mxu0 %v273
  %297 = vmatprep.subr.bf16.mxu0 0
  %298 = vmatpush1.bf16.msra.mxu0 %v274
  %299 = vmatprep.subr.bf16.mxu0 0
  %300 = vmatpush1.bf16.msra.mxu0 0
  %301 = vmatprep.subr.bf16.mxu0 0
  %302 = vmatpush1.bf16.msra.mxu0 0
  %303 = vmatprep.subr.bf16.mxu0 0
  %304 = vmatpush1.bf16.msra.mxu0 0
  %305 = vmatprep.subr.bf16.mxu0 0
  %306 = vmatpush1.bf16.msra.mxu0 0
  %307 = vmatprep.subr.bf16.mxu0 0
  %308 = vmatpush1.bf16.msra.mxu0 0
  %309 = vmatprep.subr.bf16.mxu0 0
  %310 = vmatpush1.bf16.msra.mxu0 0
  %311 = vmatprep.subr.bf16.mxu0 0
  %312 = vmatpush1.bf16.msra.mxu0 0
  %313 = vmatprep.subr.bf16.mxu0 0
  %314 = vmatpush1.bf16.msra.mxu0 0
  %315 = vmatprep.mubr.bf16.mxu0 0
  %316 = vmatmul.mubr.bf16.gmra.mrb[0].mxu0 %v211
  %v317 = vpop.f32.mrb[0].mxu0
  %v318 = vadd.f32 %v233, %v317
  %v319 = vpop.f32.mrb[0].mxu0
  %v320 = vpop.f32.mrb[0].mxu0
  %v321 = vadd.f32 %v233, %v320
  %v322 = vpop.f32.mrb[0].mxu0
  %323 = vdwg.mxu0
  %324 = vmax.xlane.f32.xlu0 %v318
  %v325 = vpop.xlane.xlu0 %324
  %326 = vmax.xlane.f32.xlu0 %v321
  %v327 = vpop.xlane.xlu0 %326
  %v328 = vsub.f32 %v318, %v325
  %v329 = vsub.f32 %v321, %v327
  %v330 = vmul.f32 %v328, 1.442695
  %v331 = vpow.pop %v330
  %v332 = vmul.f32 %v329, 1.442695
  %v333 = vpow.pop %v332
  %334 = vadd.xlane.f32.xlu0 %v331
  %v335 = vpop.xlane.xlu0 %334
  %336 = vadd.xlane.f32.xlu0 %v333
  %v337 = vpop.xlane.xlu0 %336
  %v338 = vrcp.pop %v335
  %v339 = vmul.f32 %v331, %v338
  %v340 = vrcp.pop %v337
  %v341 = vmul.f32 %v333, %v340
  %342 = vst [vmem:[%s7] sm:$0xff] %v339
  %343 = vst [vmem:[%s7 + $0x8] sm:$0xff] %v341
  // Predicated region
  $region30: #{policy_network_forward.1} parent=0 // pred_check
    _
  $region31: #{policy_network_forward.1} parent=0 // pred_check_branch
    %345 = sbr.rel (0) target = $region33
  $region32: #{policy_network_forward.1} parent=0 // pred_region
    _
  $region33: #{policy_network_forward.1} parent=0 // pred_fallthru
    _
  // Predicated region
  $region34: #{policy_network_forward.1} parent=0 // pred_check
    _
  $region35: #{policy_network_forward.1} parent=0 // pred_check_branch
    %347 = sbr.rel (0) target = $region37
  $region36: #{policy_network_forward.1} parent=0 // pred_region
    _
  $region37: #{policy_network_forward.1} parent=0 // pred_fallthru
    _

</llo_original>
